<compile_context>
chip_gen: v7x
topology: tpu7x:2x2x1
jax: 0.10.0
libtpu: 0.0.40
codegen_flags: <defaults>
</compile_context>

<pallas_src>
import functools

import jax
import jax.numpy as jnp
from jax.experimental import pallas as pl
from jax.experimental.pallas import tpu as pltpu

HIDDEN = 256


def _round_up(x, m):
    return ((x + m - 1) // m) * m


def actor_critic_kernel(x_ref, w1_ref, b1_ref, wh_ref, bh_ref, logits_ref, value_ref):
    # Trunk: Linear(state_dim -> 256) + ReLU, f32 accumulation on the MXU/VPU.
    h = jnp.dot(x_ref[...], w1_ref[...], preferred_element_type=jnp.float32)
    h = jnp.maximum(h + b1_ref[...], 0.0)

    # Fused heads: one [block_b, n_actions+1] matmul covering logits and value.
    out = jnp.dot(h, wh_ref[...], preferred_element_type=jnp.float32) + bh_ref[...]

    # Write only the useful columns (two narrow outputs -> minimal HBM writeback,
    # no post-kernel slicing of a padded slab).
    logits_ref[...] = out[:, :-1].astype(logits_ref.dtype)
    value_ref[...] = out[:, -1:].astype(value_ref.dtype)


def _choose_block_b(B, block_b_max):
    """Biggest batch tile that (a) fits the cap and (b) keeps >=2 grid steps when
    the batch allows it (v7x has 2 TensorCores; v5e/v6e are unaffected)."""
    if B <= 16:
        return _round_up(max(B, 1), 8)
    half_batch = _round_up(pl.cdiv(B, 2), 8)
    return min(block_b_max, half_batch)


@functools.partial(jax.jit, static_argnames=("block_b_max",))
def actor_critic_forward(states, fused_params, *, block_b_max=1024):
    """states: [B, state_dim] f32. fused_params: output of fuse_params().
    Returns (logits [B, n_actions], value [B, 1])."""
    w1, b1 = fused_params["w1"], fused_params["b1"]
    wh, bh = fused_params["wh"], fused_params["bh"]
    B, D = states.shape
    head_dim = wh.shape[1]          # n_actions + 1
    n_actions = head_dim - 1

    block_b = _choose_block_b(B, block_b_max)
    grid = (pl.cdiv(B, block_b),)   # ragged last block: out-of-range rows are masked

    in_specs = [
        pl.BlockSpec((block_b, D), lambda i: (i, 0)),         # states tile
        pl.BlockSpec((D, HIDDEN), lambda i: (0, 0)),          # w1 (VMEM-resident)
        pl.BlockSpec((1, HIDDEN), lambda i: (0, 0)),          # b1 (VMEM-resident)
        pl.BlockSpec((HIDDEN, head_dim), lambda i: (0, 0)),   # fused head W (resident)
        pl.BlockSpec((1, head_dim), lambda i: (0, 0)),        # fused head b (resident)
    ]
    out_specs = (
        pl.BlockSpec((block_b, n_actions), lambda i: (i, 0)),
        pl.BlockSpec((block_b, 1), lambda i: (i, 0)),
    )
    out_shape = (
        jax.ShapeDtypeStruct((B, n_actions), states.dtype),
        jax.ShapeDtypeStruct((B, 1), states.dtype),
    )

    flops = 2 * B * D * HIDDEN + 2 * B * HIDDEN * head_dim
    bytes_accessed = 4 * (B * D + B * head_dim
                          + D * HIDDEN + HIDDEN + HIDDEN * head_dim + head_dim)

    logits, value = pl.pallas_call(
        actor_critic_kernel,
        grid=grid,
        in_specs=in_specs,
        out_specs=out_specs,
        out_shape=out_shape,
        compiler_params=pltpu.CompilerParams(
            dimension_semantics=("parallel",),
            vmem_limit_bytes=32 * 1024 * 1024,
        ),
        cost_estimate=pl.CostEstimate(
            flops=flops, transcendentals=0, bytes_accessed=bytes_accessed),
    )(states, w1, b1, wh, bh)
    return logits, value


def fuse_params(params):
    """One-time (hoisted out of the hot path): fuse the logits and value heads into
    a single [256, n_actions+1] weight/bias so the kernel runs one head matmul."""
    wh = jnp.concatenate([params["wl"], params["wv"]], axis=1)
    bh = jnp.concatenate([params["bl"], params["bv"]], axis=1)
    return {"w1": params["w1"], "b1": params["b1"], "wh": wh, "bh": bh}


def init_params(key, state_dim, n_actions):
    """Deterministic init, PyTorch-Linear-style uniform(-1/sqrt(fan_in), 1/sqrt(fan_in))."""
    ks = jax.random.split(key, 6)

    def uniform(k, shape, fan_in):
        bound = 1.0 / jnp.sqrt(jnp.float32(fan_in))
        return jax.random.uniform(k, shape, jnp.float32, -bound, bound)

    return {
        "w1": uniform(ks[0], (state_dim, HIDDEN), state_dim),
        "b1": uniform(ks[1], (1, HIDDEN), state_dim),
        "wl": uniform(ks[2], (HIDDEN, n_actions), HIDDEN),
        "bl": uniform(ks[3], (1, n_actions), HIDDEN),
        "wv": uniform(ks[4], (HIDDEN, 1), HIDDEN),
        "bv": uniform(ks[5], (1, 1), HIDDEN),
    }


def reference_forward(states, params):
    h = jnp.maximum(states @ params["w1"] + params["b1"], 0.0)
    return h @ params["wl"] + params["bl"], h @ params["wv"] + params["bv"]


if __name__ == "__main__":
    key = jax.random.PRNGKey(0)
    k_x, k_p = jax.random.split(key)

    state_dim, n_actions = 32, 8
    params = init_params(k_p, state_dim, n_actions)
    fused = fuse_params(params)   # built once, reused across forward calls

    # Two batch sizes: one that tiles evenly (2 full blocks) and one that
    # exercises the ragged (masked) last block path with no explicit padding.
    for batch in (384, 100):
        states = jax.random.normal(jax.random.fold_in(k_x, batch),
                                   (batch, state_dim), jnp.float32)
        logits, value = actor_critic_forward(states, fused)
        jax.block_until_ready((logits, value))

        ref_logits, ref_value = reference_forward(states, params)
        assert logits.shape == (batch, n_actions)
        assert value.shape == (batch, 1)
        assert jnp.allclose(logits, ref_logits, atol=1e-5, rtol=1e-5)
        assert jnp.allclose(value, ref_value, atol=1e-5, rtol=1e-5)

    print("KERNEL_OK")
</pallas_src>

<mosaic_0001>
module attributes {stable_mosaic.version = 11 : i64} {
  func.func @actor_critic_kernel(%arg0: i32, %arg1: memref<192x32xf32, #tpu.memory_space<vmem>>, %arg2: memref<32x256xf32, #tpu.memory_space<vmem>>, %arg3: memref<1x256xf32, #tpu.memory_space<vmem>>, %arg4: memref<256x9xf32, #tpu.memory_space<vmem>>, %arg5: memref<1x9xf32, #tpu.memory_space<vmem>>, %arg6: memref<192x8xf32, #tpu.memory_space<vmem>>, %arg7: memref<192x1xf32, #tpu.memory_space<vmem>>) attributes {dimension_semantics = [#tpu.dimension_semantics<parallel>], iteration_bounds = array<i64: 2>, scalar_prefetch = 0 : i64, scratch_operands = 0 : i64, tpu.core_type = #tpu.core_type<tc>, window_params = [{transform_indices = @transform_0, window_bounds = array<i64: 192, 32>}, {pipeline_mode = #tpu.pipeline_mode<synchronous>, transform_indices = @transform_1, window_bounds = array<i64: 32, 256>}, {pipeline_mode = #tpu.pipeline_mode<synchronous>, transform_indices = @transform_2, window_bounds = array<i64: 1, 256>}, {pipeline_mode = #tpu.pipeline_mode<synchronous>, transform_indices = @transform_3, window_bounds = array<i64: 256, 9>}, {pipeline_mode = #tpu.pipeline_mode<synchronous>, transform_indices = @transform_4, window_bounds = array<i64: 1, 9>}, {transform_indices = @transform_5, window_bounds = array<i64: 192, 8>}, {transform_indices = @transform_6, window_bounds = array<i64: 192, 1>}]} {
    %c0 = arith.constant 0 : index
    %c0_0 = arith.constant 0 : index
    %0 = vector.load %arg1[%c0, %c0_0] : memref<192x32xf32, #tpu.memory_space<vmem>>, vector<192x32xf32>
    %c0_1 = arith.constant 0 : index
    %c0_2 = arith.constant 0 : index
    %1 = vector.load %arg2[%c0_1, %c0_2] : memref<32x256xf32, #tpu.memory_space<vmem>>, vector<32x256xf32>
    %cst = arith.constant dense<0.000000e+00> : vector<192x256xf32>
    %2 = tpu.matmul %0, %1, %cst {dimension_numbers = #tpu.dot_dimension_numbers<[1], [0], [0], [1], [0, 0, 1, 1], [], []>} : vector<192x32xf32>, vector<32x256xf32>, vector<192x256xf32> -> vector<192x256xf32>
    %c0_3 = arith.constant 0 : index
    %c0_4 = arith.constant 0 : index
    %3 = vector.load %arg3[%c0_3, %c0_4] : memref<1x256xf32, #tpu.memory_space<vmem>>, vector<1x256xf32>
    %4 = vector.broadcast %3 : vector<1x256xf32> to vector<192x256xf32>
    %5 = arith.addf %2, %4 : vector<192x256xf32>
    %cst_5 = arith.constant 0.000000e+00 : f32
    %6 = vector.broadcast %cst_5 : f32 to vector<192x256xf32>
    %7 = arith.maximumf %5, %6 : vector<192x256xf32>
    %c0_6 = arith.constant 0 : index
    %c0_7 = arith.constant 0 : index
    %8 = vector.load %arg4[%c0_6, %c0_7] : memref<256x9xf32, #tpu.memory_space<vmem>>, vector<256x9xf32>
    %cst_8 = arith.constant dense<0.000000e+00> : vector<192x9xf32>
    %9 = tpu.matmul %7, %8, %cst_8 {dimension_numbers = #tpu.dot_dimension_numbers<[1], [0], [0], [1], [0, 0, 1, 1], [], []>} : vector<192x256xf32>, vector<256x9xf32>, vector<192x9xf32> -> vector<192x9xf32>
    %c0_9 = arith.constant 0 : index
    %c0_10 = arith.constant 0 : index
    %10 = vector.load %arg5[%c0_9, %c0_10] : memref<1x9xf32, #tpu.memory_space<vmem>>, vector<1x9xf32>
    %11 = vector.broadcast %10 : vector<1x9xf32> to vector<192x9xf32>
    %12 = arith.addf %9, %11 : vector<192x9xf32>
    %13 = vector.extract_strided_slice %12 {offsets = [0, 0], sizes = [192, 8], strides = [1, 1]} : vector<192x9xf32> to vector<192x8xf32>
    %c0_11 = arith.constant 0 : index
    %c0_12 = arith.constant 0 : index
    %14 = vector.load %arg6[%c0_11, %c0_12] : memref<192x8xf32, #tpu.memory_space<vmem>>, vector<192x8xf32>
    tpu.vector_store %arg6[%c0_11, %c0_12], %13 {strides = array<i32>} : memref<192x8xf32, #tpu.memory_space<vmem>>, vector<192x8xf32>,
    %15 = vector.extract_strided_slice %12 {offsets = [0, 8], sizes = [192, 1], strides = [1, 1]} : vector<192x9xf32> to vector<192x1xf32>
    %c0_13 = arith.constant 0 : index
    %c0_14 = arith.constant 0 : index
    %16 = vector.load %arg7[%c0_13, %c0_14] : memref<192x1xf32, #tpu.memory_space<vmem>>, vector<192x1xf32>
    tpu.vector_store %arg7[%c0_13, %c0_14], %15 {strides = array<i32>} : memref<192x1xf32, #tpu.memory_space<vmem>>, vector<192x1xf32>,
    return
  }
  func.func @transform_0(%arg0: i32) -> (i32, i32) {
    %c0_i32 = arith.constant 0 : i32
    %c0_i32_0 = arith.constant 0 : i32
    return %arg0, %c0_i32 : i32, i32
  }
  func.func @transform_1(%arg0: i32) -> (i32, i32) {
    %c0_i32 = arith.constant 0 : i32
    %c0_i32_0 = arith.constant 0 : i32
    %c0_i32_1 = arith.constant 0 : i32
    return %c0_i32, %c0_i32_0 : i32, i32
  }
  func.func @transform_2(%arg0: i32) -> (i32, i32) {
    %c0_i32 = arith.constant 0 : i32
    %c0_i32_0 = arith.constant 0 : i32
    %c0_i32_1 = arith.constant 0 : i32
    return %c0_i32, %c0_i32_0 : i32, i32
  }
  func.func @transform_3(%arg0: i32) -> (i32, i32) {
    %c0_i32 = arith.constant 0 : i32
    %c0_i32_0 = arith.constant 0 : i32
    %c0_i32_1 = arith.constant 0 : i32
    return %c0_i32, %c0_i32_0 : i32, i32
  }
  func.func @transform_4(%arg0: i32) -> (i32, i32) {
    %c0_i32 = arith.constant 0 : i32
    %c0_i32_0 = arith.constant 0 : i32
    %c0_i32_1 = arith.constant 0 : i32
    return %c0_i32, %c0_i32_0 : i32, i32
  }
  func.func @transform_5(%arg0: i32) -> (i32, i32) {
    %c0_i32 = arith.constant 0 : i32
    %c0_i32_0 = arith.constant 0 : i32
    return %arg0, %c0_i32 : i32, i32
  }
  func.func @transform_6(%arg0: i32) -> (i32, i32) {
    %c0_i32 = arith.constant 0 : i32
    %c0_i32_0 = arith.constant 0 : i32
    return %arg0, %c0_i32 : i32, i32
  }
}

</mosaic_0001>

<llo_original>
// kernel: actor_critic_forward.1
$region0: #{actor_critic_forward.1}
  #allocation0 [shape = 'u32[]', space=smem, size = 0x4, offset = 0x4, fixed_abs, tag = 'smem constant byte address 0x4 - core index']
  #allocation1 [shape = 'u32[144,128]{1,0:T(1,128)}', space=vmem, size = 0x12000, scoped, tag = 'internal scratch']
  %s0 = inlined_call_operand.vmem [shape: f32[384,32], index: 0, kind: input, shape index: {}]
  %s1 = inlined_call_operand.vmem [shape: f32[32,256], index: 1, kind: input, shape index: {}]
  %s2 = inlined_call_operand.vmem [shape: f32[1,256], index: 2, kind: input, shape index: {}]
  %s3 = inlined_call_operand.vmem [shape: f32[256,9], index: 3, kind: input, shape index: {}]
  %s4 = inlined_call_operand.vmem [shape: f32[1,9], index: 4, kind: input, shape index: {}]
  %s5 = inlined_call_operand.vmem [shape: f32[384,8], index: 5, kind: output, shape index: {0}]
  %s6 = inlined_call_operand.vmem [shape: f32[384,1], index: 6, kind: output, shape index: {1}]
  %7 = xla_tuple %s5, %s6
  %s8 = sld [smem:[#allocation0]]
  $region61: #{actor_critic_forward.1} parent=0
    _
  %s10 = ssub.s32 1, %s8
  %s11 = scalar_select 0, %s10, %s8
  loop: start=0, step=1, limit=4
  $region2: #{actor_critic_forward.1} parent=0 // loop_pre_header
    _
  $region3: #{actor_critic_forward.1} parent=0 // loop_header
    %s13 = sphi 0, %s17
    %p14 = scmp.ge.s32.totalorder %s13, 4
    %s23 = sphi 0, %s25
    %s26 = sphi 0, %s23
    %s27 = sphi 0, %s26
    %s43 = sphi 0, %s27
    %s47 = sphi 0, %s47
    %s49 = sphi 0, %s47
    %s50 = sphi 0, %s49
    %s64 = sphi 0, %s50
    %s68 = sphi 0, %s68
    %s70 = sphi 0, %s68
    %s71 = sphi 0, %s70
    %s85 = sphi 0, %s71
    %s89 = sphi 0, %s89
    %s91 = sphi 0, %s89
    %s92 = sphi 0, %s91
    %s106 = sphi 0, %s92
    %s110 = sphi 0, %s110
    %s112 = sphi 0, %s110
    %s113 = sphi 0, %s112
    %s127 = sphi 0, %s113
    %s133 = sphi 0, %s135
    %s136 = sphi 0, %s133
    %s137 = sphi 0, %s136
    %s153 = sphi 0, %s137
    %s159 = sphi 0, %s161
    %s162 = sphi 0, %s159
    %s163 = sphi 0, %s162
    %s179 = sphi 0, %s163
  $region4: #{actor_critic_forward.1} parent=0 // loop_header_branch
    %16 = sbr.rel (%p14) target = $region8
  $region5: #{actor_critic_forward.1} parent=0 // loop_body
    %s18 = ssub.s32 %s13, 1
    %s19 = ssub.s32 %s13, 2
    %s20 = sadd.s32 %s13, 1
    %s21 = ssub.s32 %s13, %s20
    %p22 = scmp.eq.s32.totalorder %s21, 0
    %s24 = sadd.s32 %s23, 1
    %s25 = scalar_select %p22, %s23, %s24
    %p28 = pneg %p22
    %p29 = scmp.eq.s32.totalorder %s13, 1
    %p30 = por %p28, %p29
    %p31 = scmp.ne.s32.totalorder %s23, %s26
    %p32 = scmp.eq.s32.totalorder %s13, 0
    %p33 = por %p31, %p32
    %p34 = scmp.ne.s32.totalorder %s23, %s26
    %p35 = scmp.eq.s32.totalorder %s18, 1
    %p36 = por %p34, %p35
    %p37 = scmp.ne.s32.totalorder %s26, %s27
    %p38 = scmp.eq.s32.totalorder %s18, 0
    %p39 = por %p37, %p38
    %p40 = scmp.ne.s32.totalorder %s26, %s27
    %p41 = scmp.eq.s32.totalorder %s19, 1
    %p42 = por %p40, %p41
    %p44 = scmp.ne.s32.totalorder %s27, %s43
    %p45 = scmp.eq.s32.totalorder %s19, 0
    %p46 = por %p44, %p45
    %s48 = sadd.s32 %s47, 1
    %p51 = scmp.eq.s32.totalorder %s13, 1
    %p52 = scmp.ne.s32.totalorder %s47, %s49
    %p53 = scmp.eq.s32.totalorder %s13, 0
    %p54 = por %p52, %p53
    %p55 = scmp.ne.s32.totalorder %s47, %s49
    %p56 = scmp.eq.s32.totalorder %s18, 1
    %p57 = por %p55, %p56
    %p58 = scmp.ne.s32.totalorder %s49, %s50
    %p59 = scmp.eq.s32.totalorder %s18, 0
    %p60 = por %p58, %p59
    %p61 = scmp.ne.s32.totalorder %s49, %s50
    %p62 = scmp.eq.s32.totalorder %s19, 1
    %p63 = por %p61, %p62
    %p65 = scmp.ne.s32.totalorder %s50, %s64
    %p66 = scmp.eq.s32.totalorder %s19, 0
    %p67 = por %p65, %p66
    %s69 = sadd.s32 %s68, 1
    %p72 = scmp.eq.s32.totalorder %s13, 1
    %p73 = scmp.ne.s32.totalorder %s68, %s70
    %p74 = scmp.eq.s32.totalorder %s13, 0
    %p75 = por %p73, %p74
    %p76 = scmp.ne.s32.totalorder %s68, %s70
    %p77 = scmp.eq.s32.totalorder %s18, 1
    %p78 = por %p76, %p77
    %p79 = scmp.ne.s32.totalorder %s70, %s71
    %p80 = scmp.eq.s32.totalorder %s18, 0
    %p81 = por %p79, %p80
    %p82 = scmp.ne.s32.totalorder %s70, %s71
    %p83 = scmp.eq.s32.totalorder %s19, 1
    %p84 = por %p82, %p83
    %p86 = scmp.ne.s32.totalorder %s71, %s85
    %p87 = scmp.eq.s32.totalorder %s19, 0
    %p88 = por %p86, %p87
    %s90 = sadd.s32 %s89, 1
    %p93 = scmp.eq.s32.totalorder %s13, 1
    %p94 = scmp.ne.s32.totalorder %s89, %s91
    %p95 = scmp.eq.s32.totalorder %s13, 0
    %p96 = por %p94, %p95
    %p97 = scmp.ne.s32.totalorder %s89, %s91
    %p98 = scmp.eq.s32.totalorder %s18, 1
    %p99 = por %p97, %p98
    %p100 = scmp.ne.s32.totalorder %s91, %s92
    %p101 = scmp.eq.s32.totalorder %s18, 0
    %p102 = por %p100, %p101
    %p103 = scmp.ne.s32.totalorder %s91, %s92
    %p104 = scmp.eq.s32.totalorder %s19, 1
    %p105 = por %p103, %p104
    %p107 = scmp.ne.s32.totalorder %s92, %s106
    %p108 = scmp.eq.s32.totalorder %s19, 0
    %p109 = por %p107, %p108
    %s111 = sadd.s32 %s110, 1
    %p114 = scmp.eq.s32.totalorder %s13, 1
    %p115 = scmp.ne.s32.totalorder %s110, %s112
    %p116 = scmp.eq.s32.totalorder %s13, 0
    %p117 = por %p115, %p116
    %p118 = scmp.ne.s32.totalorder %s110, %s112
    %p119 = scmp.eq.s32.totalorder %s18, 1
    %p120 = por %p118, %p119
    %p121 = scmp.ne.s32.totalorder %s112, %s113
    %p122 = scmp.eq.s32.totalorder %s18, 0
    %p123 = por %p121, %p122
    %p124 = scmp.ne.s32.totalorder %s112, %s113
    %p125 = scmp.eq.s32.totalorder %s19, 1
    %p126 = por %p124, %p125
    %p128 = scmp.ne.s32.totalorder %s113, %s127
    %p129 = scmp.eq.s32.totalorder %s19, 0
    %p130 = por %p128, %p129
    %s131 = ssub.s32 %s13, %s20
    %p132 = scmp.eq.s32.totalorder %s131, 0
    %s134 = sadd.s32 %s133, 1
    %s135 = scalar_select %p132, %s133, %s134
    %p138 = pneg %p132
    %p139 = scmp.eq.s32.totalorder %s13, 1
    %p140 = por %p138, %p139
    %p141 = scmp.ne.s32.totalorder %s133, %s136
    %p142 = scmp.eq.s32.totalorder %s13, 0
    %p143 = por %p141, %p142
    %p144 = scmp.ne.s32.totalorder %s133, %s136
    %p145 = scmp.eq.s32.totalorder %s18, 1
    %p146 = por %p144, %p145
    %p147 = scmp.ne.s32.totalorder %s136, %s137
    %p148 = scmp.eq.s32.totalorder %s18, 0
    %p149 = por %p147, %p148
    %p150 = scmp.ne.s32.totalorder %s136, %s137
    %p151 = scmp.eq.s32.totalorder %s19, 1
    %p152 = por %p150, %p151
    %p154 = scmp.ne.s32.totalorder %s137, %s153
    %p155 = scmp.eq.s32.totalorder %s19, 0
    %p156 = por %p154, %p155
    %s157 = ssub.s32 %s13, %s20
    %p158 = scmp.eq.s32.totalorder %s157, 0
    %s160 = sadd.s32 %s159, 1
    %s161 = scalar_select %p158, %s159, %s160
    %p164 = pneg %p158
    %p165 = scmp.eq.s32.totalorder %s13, 1
    %p166 = por %p164, %p165
    %p167 = scmp.ne.s32.totalorder %s159, %s162
    %p168 = scmp.eq.s32.totalorder %s13, 0
    %p169 = por %p167, %p168
    %p170 = scmp.ne.s32.totalorder %s159, %s162
    %p171 = scmp.eq.s32.totalorder %s18, 1
    %p172 = por %p170, %p171
    %p173 = scmp.ne.s32.totalorder %s162, %s163
    %p174 = scmp.eq.s32.totalorder %s18, 0
    %p175 = por %p173, %p174
    %p176 = scmp.ne.s32.totalorder %s162, %s163
    %p177 = scmp.eq.s32.totalorder %s19, 1
    %p178 = por %p176, %p177
    %p180 = scmp.ne.s32.totalorder %s163, %s179
    %p181 = scmp.eq.s32.totalorder %s19, 0
    %p182 = por %p180, %p181
    %p183 = scmp.le.s32.totalorder 1, %s13
    %p184 = scmp.lt.s32.totalorder %s13, 3
    %p185 = pnand %p183, %p184
    %p186 = pneg %p185
    // Predicated region
    $region9: #{actor_critic_forward.1} parent=5 // pred_check
      _
    $region10: #{actor_critic_forward.1} parent=5 // pred_check_branch
      %188 = sbr.rel (%p185) target = $region12
    $region11: #{actor_critic_forward.1} parent=5 // pred_region
      %s189 = ssub.s32 %s13, 1
      // Predicated region
      $region13: #{actor_critic_forward.1} parent=11 // pred_check
        %p190 = pneg %p60
      $region14: #{actor_critic_forward.1} parent=11 // pred_check_branch
        %192 = sbr.rel (%p190) target = $region16
      $region15: #{actor_critic_forward.1} parent=11 // pred_region
        _
      $region16: #{actor_critic_forward.1} parent=11 // pred_fallthru
        _
      // Predicated region
      $region17: #{actor_critic_forward.1} parent=11 // pred_check
        %p193 = pneg %p81
      $region18: #{actor_critic_forward.1} parent=11 // pred_check_branch
        %195 = sbr.rel (%p193) target = $region20
      $region19: #{actor_critic_forward.1} parent=11 // pred_region
        _
      $region20: #{actor_critic_forward.1} parent=11 // pred_fallthru
        _
      // Predicated region
      $region21: #{actor_critic_forward.1} parent=11 // pred_check
        %p196 = pneg %p102
      $region22: #{actor_critic_forward.1} parent=11 // pred_check_branch
        %198 = sbr.rel (%p196) target = $region24
      $region23: #{actor_critic_forward.1} parent=11 // pred_region
        _
      $region24: #{actor_critic_forward.1} parent=11 // pred_fallthru
        _
      // Predicated region
      $region25: #{actor_critic_forward.1} parent=11 // pred_check
        %p199 = pneg %p123
      $region26: #{actor_critic_forward.1} parent=11 // pred_check_branch
        %201 = sbr.rel (%p199) target = $region28
      $region27: #{actor_critic_forward.1} parent=11 // pred_region
        _
      $region28: #{actor_critic_forward.1} parent=11 // pred_fallthru
        _
    $region12: #{actor_critic_forward.1} parent=5 // pred_fallthru
      _
    %p202 = scmp.lt.s32.totalorder %s13, 2
    // Predicated region
    $region29: #{actor_critic_forward.1} parent=5 // pred_check
      %p203 = pneg %p202
    $region30: #{actor_critic_forward.1} parent=5 // pred_check_branch
      %205 = sbr.rel (%p203) target = $region32
    $region31: #{actor_critic_forward.1} parent=5 // pred_region
      // Predicated region
      $region33: #{actor_critic_forward.1} parent=31 // pred_check
        %p206 = pneg %p33
      $region34: #{actor_critic_forward.1} parent=31 // pred_check_branch
        %208 = sbr.rel (%p206) target = $region36
      $region35: #{actor_critic_forward.1} parent=31 // pred_region
        %s209 = smul.u32 24, %s13
        %p210 = scmp.lt.s32.totalorder %s209, 47
        %s211 = scalar_select %p210, %s209, 47
        %s212 = smul.addr %s211, 8
        %s213 = scalar_lea.vmem %s0, %s212
        %s214 = smul.u32 24, %s13
      $region36: #{actor_critic_forward.1} parent=31 // pred_fallthru
        _
    $region32: #{actor_critic_forward.1} parent=5 // pred_fallthru
      _
    %p215 = scmp.le.s32.totalorder 1, %s13
    %p216 = scmp.lt.s32.totalorder %s13, 3
    %p217 = pnand %p215, %p216
    %p218 = pneg %p217
    // Predicated region
    $region37: #{actor_critic_forward.1} parent=5 // pred_check
      _
    $region38: #{actor_critic_forward.1} parent=5 // pred_check_branch
      %220 = sbr.rel (%p217) target = $region40
    $region39: #{actor_critic_forward.1} parent=5 // pred_region
      %s221 = ssub.s32 %s13, 1
      %s222 = smul.u32 24, %s18
      %p223 = scmp.lt.s32.totalorder %s222, 47
      %s224 = scalar_select %p223, %s222, 47
      %s225 = smul.addr %s224, 8
      %s226 = scalar_lea.vmem %s0, %s225
      %p227 = pneg %p39
      %p228 = pneg %p36
      %p229 = pneg %p60
      %p230 = pneg %p57
      %p231 = pneg %p81
      %p232 = pneg %p78
      %p233 = pneg %p102
      %p234 = pneg %p99
      %p235 = pneg %p123
      %p236 = pneg %p120
      %p237 = pneg %p149
      %p238 = pneg %p146
      %s239 = smul.u32 24, %s18
      %p240 = scmp.lt.s32.totalorder %s239, 47
      %s241 = scalar_select %p240, %s239, 47
      %s242 = smul.addr %s241, 8
      %s243 = scalar_lea.vmem %s5, %s242
      %p244 = pneg %p175
      %p245 = pneg %p172
      %s246 = smul.u32 24, %s18
      %p247 = scmp.lt.s32.totalorder %s246, 47
      %s248 = scalar_select %p247, %s246, 47
      %s249 = smul.addr %s248, 8
      %s250 = scalar_lea.vmem %s6, %s249
      %s251 = smul.u32 24, %s18
      %p252 = scmp.lt.s32.totalorder %s251, 47
      %s253 = scalar_select %p252, %s251, 47
      %s254 = smul.addr %s253, 8
      %s255 = scalar_lea.vmem %s0, %s254
      %s256 = smul.u32 24, %s18
      %s257 = smul.u32 24, %s18
      %p258 = scmp.lt.s32.totalorder %s257, 47
      %s259 = scalar_select %p258, %s257, 47
      %s260 = smul.addr %s259, 8
      %s261 = scalar_lea.vmem %s5, %s260
      %s262 = smul.u32 24, %s18
      %s263 = smul.u32 24, %s18
      %p264 = scmp.lt.s32.totalorder %s263, 47
      %s265 = scalar_select %p264, %s263, 47
      %s266 = smul.addr %s265, 8
      %s267 = scalar_lea.vmem %s6, %s266
      %s268 = smul.u32 24, %s18
      %v269 = vld [vmem:[%s255] sm:$0xff]
      %v270 = vld [vmem:[%s255 + $0x8] sm:$0xff]
      %v271 = vld [vmem:[%s255 + $0x10] sm:$0xff]
      %v272 = vld [vmem:[%s255 + $0x18] sm:$0xff]
      %v273 = vld [vmem:[%s255 + $0x20] sm:$0xff]
      %v274 = vld [vmem:[%s255 + $0x28] sm:$0xff]
      %v275 = vld [vmem:[%s255 + $0x30] sm:$0xff]
      %v276 = vld [vmem:[%s255 + $0x38] sm:$0xff]
      %v277 = vld [vmem:[%s255 + $0x40] sm:$0xff]
      %v278 = vld [vmem:[%s255 + $0x48] sm:$0xff]
      %v279 = vld [vmem:[%s255 + $0x50] sm:$0xff]
      %v280 = vld [vmem:[%s255 + $0x58] sm:$0xff]
      %v281 = vld [vmem:[%s255 + $0x60] sm:$0xff]
      %v282 = vld [vmem:[%s255 + $0x68] sm:$0xff]
      %v283 = vld [vmem:[%s255 + $0x70] sm:$0xff]
      %v284 = vld [vmem:[%s255 + $0x78] sm:$0xff]
      %v285 = vld [vmem:[%s255 + $0x80] sm:$0xff]
      %v286 = vld [vmem:[%s255 + $0x88] sm:$0xff]
      %v287 = vld [vmem:[%s255 + $0x90] sm:$0xff]
      %v288 = vld [vmem:[%s255 + $0x98] sm:$0xff]
      %v289 = vld [vmem:[%s255 + $0xa0] sm:$0xff]
      %v290 = vld [vmem:[%s255 + $0xa8] sm:$0xff]
      %v291 = vld [vmem:[%s255 + $0xb0] sm:$0xff]
      %v292 = vld [vmem:[%s255 + $0xb8] sm:$0xff]
      %v293 = vld [vmem:[%s1] sm:$0xff]
      %v294 = vld [vmem:[%s1 + $0x8] sm:$0xff]
      %v295 = vld [vmem:[%s1 + $0x10] sm:$0xff]
      %v296 = vld [vmem:[%s1 + $0x18] sm:$0xff]
      %v297 = vld [vmem:[%s1 + $0x20] sm:$0xff]
      %v298 = vld [vmem:[%s1 + $0x28] sm:$0xff]
      %v299 = vld [vmem:[%s1 + $0x30] sm:$0xff]
      %v300 = vld [vmem:[%s1 + $0x38] sm:$0xff]
      %v301 = vld [vmem:[%s2] sm:$0x3]
      %v303 = vlaneseq
      %v304 = vshrl.u32 %v303, 7
      %v305 = vsub.s32 0, %v304
      %v306 = vrot.slane %v301, %v305
      %v307 = vlaneseq
      %v308 = vshrl.u32 %v307, 7
      %v309 = vsub.s32 1, %v308
      %v310 = vrot.slane %v301, %v309
      %vm313 = vcmask 261120
      %v315 = vsel %vm313, %v269, 0
      %v318 = vsel %vm313, %v270, 0
      %v321 = vsel %vm313, %v271, 0
      %v324 = vsel %vm313, %v272, 0
      %v327 = vsel %vm313, %v273, 0
      %v330 = vsel %vm313, %v274, 0
      %v333 = vsel %vm313, %v275, 0
      %v336 = vsel %vm313, %v276, 0
      %v339 = vsel %vm313, %v277, 0
      %v342 = vsel %vm313, %v278, 0
      %v345 = vsel %vm313, %v279, 0
      %v348 = vsel %vm313, %v280, 0
      %v351 = vsel %vm313, %v281, 0
      %v354 = vsel %vm313, %v282, 0
      %v357 = vsel %vm313, %v283, 0
      %v360 = vsel %vm313, %v284, 0
      %v363 = vsel %vm313, %v285, 0
      %v366 = vsel %vm313, %v286, 0
      %v369 = vsel %vm313, %v287, 0
      %v372 = vsel %vm313, %v288, 0
      %v375 = vsel %vm313, %v289, 0
      %v378 = vsel %vm313, %v290, 0
      %v381 = vsel %vm313, %v291, 0
      %v384 = vsel %vm313, %v292, 0
      %386 = vmatprep.subr.mxu0 %v294
      %387 = vmatpush1.msra.mxu0 %v293
      %388 = vmatprep.subr.mxu0 %v296
      %389 = vmatpush1.msra.mxu0 %v295
      %390 = vmatprep.subr.mxu0 %v298
      %391 = vmatpush1.msra.mxu0 %v297
      %392 = vmatprep.subr.mxu0 %v300
      %393 = vmatpush1.msra.mxu0 %v299
      %394 = vmatprep.subr.mxu0 0.0
      %395 = vmatpush1.msra.mxu0 0.0
      %396 = vmatprep.subr.mxu0 0.0
      %397 = vmatpush1.msra.mxu0 0.0
      %398 = vmatprep.subr.mxu0 0.0
      %399 = vmatpush1.msra.mxu0 0.0
      %400 = vmatprep.subr.mxu0 0.0
      %401 = vmatpush1.msra.mxu0 0.0
      %402 = vmatprep.subr.mxu0 0.0
      %403 = vmatpush1.msra.mxu0 0.0
      %404 = vmatprep.subr.mxu0 0.0
      %405 = vmatpush1.msra.mxu0 0.0
      %406 = vmatprep.subr.mxu0 0.0
      %407 = vmatpush1.msra.mxu0 0.0
      %408 = vmatprep.subr.mxu0 0.0
      %409 = vmatpush1.msra.mxu0 0.0
      %410 = vmatprep.subr.mxu0 0.0
      %411 = vmatpush1.msra.mxu0 0.0
      %412 = vmatprep.subr.mxu0 0.0
      %413 = vmatpush1.msra.mxu0 0.0
      %414 = vmatprep.subr.mxu0 0.0
      %415 = vmatpush1.msra.mxu0 0.0
      %416 = vmatprep.subr.mxu0 0.0
      %417 = vmatpush1.msra.mxu0 0.0
      %418 = vmatprep.subr.mxu0 0.0
      %419 = vmatpush1.msra.mxu0 0.0
      %420 = vmatprep.subr.mxu0 0.0
      %421 = vmatpush1.msra.mxu0 0.0
      %422 = vmatprep.subr.mxu0 0.0
      %423 = vmatpush1.msra.mxu0 0.0
      %424 = vmatprep.subr.mxu0 0.0
      %425 = vmatpush1.msra.mxu0 0.0
      %426 = vmatprep.subr.mxu0 0.0
      %427 = vmatpush1.msra.mxu0 0.0
      %428 = vmatprep.subr.mxu0 0.0
      %429 = vmatpush1.msra.mxu0 0.0
      %430 = vmatprep.subr.mxu0 0.0
      %431 = vmatpush1.msra.mxu0 0.0
      %432 = vmatprep.subr.mxu0 0.0
      %433 = vmatpush1.msra.mxu0 0.0
      %434 = vmatprep.subr.mxu0 0.0
      %435 = vmatpush1.msra.mxu0 0.0
      %436 = vmatprep.subr.mxu0 0.0
      %437 = vmatpush1.msra.mxu0 0.0
      %438 = vmatprep.subr.mxu0 0.0
      %439 = vmatpush1.msra.mxu0 0.0
      %440 = vmatprep.subr.mxu0 0.0
      %441 = vmatpush1.msra.mxu0 0.0
      %442 = vmatprep.subr.mxu0 0.0
      %443 = vmatpush1.msra.mxu0 0.0
      %444 = vmatprep.subr.mxu0 0.0
      %445 = vmatpush1.msra.mxu0 0.0
      %446 = vmatprep.subr.mxu0 0.0
      %447 = vmatpush1.msra.mxu0 0.0
      %448 = vmatprep.subr.mxu0 0.0
      %449 = vmatpush1.msra.mxu0 0.0
      %450 = vmatprep.mubr.f32.mxu0 0.0
      %451 = vmatmul.mubr.f32.gmra.mrb[0].mxu0 %v315
      %v452 = vpop.f32.mrb[0].mxu0
      %v453 = vadd.f32 %v306, %v452
      %v454 = vpop.f32.mrb[0].mxu0
      %v455 = vadd.f32 %v310, %v454
      %456 = vmatprep.mubr.f32.mxu0 0.0
      %457 = vmatmul.mubr.f32.gmra.mrb[0].mxu0 %v318
      %v458 = vpop.f32.mrb[0].mxu0
      %v459 = vadd.f32 %v306, %v458
      %v460 = vpop.f32.mrb[0].mxu0
      %v461 = vadd.f32 %v310, %v460
      %462 = vmatprep.mubr.f32.mxu0 0.0
      %463 = vmatmul.mubr.f32.gmra.mrb[0].mxu0 %v321
      %v464 = vpop.f32.mrb[0].mxu0
      %v465 = vadd.f32 %v306, %v464
      %v466 = vpop.f32.mrb[0].mxu0
      %v467 = vadd.f32 %v310, %v466
      %468 = vmatprep.mubr.f32.mxu0 0.0
      %469 = vmatmul.mubr.f32.gmra.mrb[0].mxu0 %v324
      %v470 = vpop.f32.mrb[0].mxu0
      %v471 = vadd.f32 %v306, %v470
      %v472 = vpop.f32.mrb[0].mxu0
      %v473 = vadd.f32 %v310, %v472
      %474 = vmatprep.mubr.f32.mxu0 0.0
      %475 = vmatmul.mubr.f32.gmra.mrb[0].mxu0 %v327
      %v476 = vpop.f32.mrb[0].mxu0
      %v477 = vadd.f32 %v306, %v476
      %v478 = vpop.f32.mrb[0].mxu0
      %v479 = vadd.f32 %v310, %v478
      %480 = vmatprep.mubr.f32.mxu0 0.0
      %481 = vmatmul.mubr.f32.gmra.mrb[0].mxu0 %v330
      %v482 = vpop.f32.mrb[0].mxu0
      %v483 = vadd.f32 %v306, %v482
      %v484 = vpop.f32.mrb[0].mxu0
      %v485 = vadd.f32 %v310, %v484
      %486 = vmatprep.mubr.f32.mxu0 0.0
      %487 = vmatmul.mubr.f32.gmra.mrb[0].mxu0 %v333
      %v488 = vpop.f32.mrb[0].mxu0
      %v489 = vadd.f32 %v306, %v488
      %v490 = vpop.f32.mrb[0].mxu0
      %v491 = vadd.f32 %v310, %v490
      %492 = vmatprep.mubr.f32.mxu0 0.0
      %493 = vmatmul.mubr.f32.gmra.mrb[0].mxu0 %v336
      %v494 = vpop.f32.mrb[0].mxu0
      %v495 = vadd.f32 %v306, %v494
      %v496 = vpop.f32.mrb[0].mxu0
      %v497 = vadd.f32 %v310, %v496
      %498 = vmatprep.mubr.f32.mxu0 0.0
      %499 = vmatmul.mubr.f32.gmra.mrb[0].mxu0 %v339
      %v500 = vpop.f32.mrb[0].mxu0
      %v501 = vadd.f32 %v306, %v500
      %v502 = vpop.f32.mrb[0].mxu0
      %v503 = vadd.f32 %v310, %v502
      %504 = vmatprep.mubr.f32.mxu0 0.0
      %505 = vmatmul.mubr.f32.gmra.mrb[0].mxu0 %v342
      %v506 = vpop.f32.mrb[0].mxu0
      %v507 = vadd.f32 %v306, %v506
      %v508 = vpop.f32.mrb[0].mxu0
      %v509 = vadd.f32 %v310, %v508
      %510 = vmatprep.mubr.f32.mxu0 0.0
      %511 = vmatmul.mubr.f32.gmra.mrb[0].mxu0 %v345
      %v512 = vpop.f32.mrb[0].mxu0
      %v513 = vadd.f32 %v306, %v512
      %v514 = vpop.f32.mrb[0].mxu0
      %v515 = vadd.f32 %v310, %v514
      %516 = vmatprep.mubr.f32.mxu0 0.0
      %517 = vmatmul.mubr.f32.gmra.mrb[0].mxu0 %v348
      %v518 = vpop.f32.mrb[0].mxu0
      %v519 = vadd.f32 %v306, %v518
      %v520 = vpop.f32.mrb[0].mxu0
      %v521 = vadd.f32 %v310, %v520
      %522 = vmatprep.mubr.f32.mxu0 0.0
      %523 = vmatmul.mubr.f32.gmra.mrb[0].mxu0 %v351
      %v524 = vpop.f32.mrb[0].mxu0
      %v525 = vadd.f32 %v306, %v524
      %v526 = vpop.f32.mrb[0].mxu0
      %v527 = vadd.f32 %v310, %v526
      %528 = vmatprep.mubr.f32.mxu0 0.0
      %529 = vmatmul.mubr.f32.gmra.mrb[0].mxu0 %v354
      %v530 = vpop.f32.mrb[0].mxu0
      %v531 = vadd.f32 %v306, %v530
      %v532 = vpop.f32.mrb[0].mxu0
      %v533 = vadd.f32 %v310, %v532
      %534 = vmatprep.mubr.f32.mxu0 0.0
      %535 = vmatmul.mubr.f32.gmra.mrb[0].mxu0 %v357
      %v536 = vpop.f32.mrb[0].mxu0
      %v537 = vadd.f32 %v306, %v536
      %v538 = vpop.f32.mrb[0].mxu0
      %v539 = vadd.f32 %v310, %v538
      %540 = vmatprep.mubr.f32.mxu0 0.0
      %541 = vmatmul.mubr.f32.gmra.mrb[0].mxu0 %v360
      %v542 = vpop.f32.mrb[0].mxu0
      %v543 = vadd.f32 %v306, %v542
      %v544 = vpop.f32.mrb[0].mxu0
      %v545 = vadd.f32 %v310, %v544
      %546 = vmatprep.mubr.f32.mxu0 0.0
      %547 = vmatmul.mubr.f32.gmra.mrb[0].mxu0 %v363
      %v548 = vpop.f32.mrb[0].mxu0
      %v549 = vadd.f32 %v306, %v548
      %v550 = vpop.f32.mrb[0].mxu0
      %v551 = vadd.f32 %v310, %v550
      %552 = vmatprep.mubr.f32.mxu0 0.0
      %553 = vmatmul.mubr.f32.gmra.mrb[0].mxu0 %v366
      %v554 = vpop.f32.mrb[0].mxu0
      %v555 = vadd.f32 %v306, %v554
      %v556 = vpop.f32.mrb[0].mxu0
      %v557 = vadd.f32 %v310, %v556
      %558 = vmatprep.mubr.f32.mxu0 0.0
      %559 = vmatmul.mubr.f32.gmra.mrb[0].mxu0 %v369
      %v560 = vpop.f32.mrb[0].mxu0
      %v561 = vadd.f32 %v306, %v560
      %v562 = vpop.f32.mrb[0].mxu0
      %v563 = vadd.f32 %v310, %v562
      %564 = vmatprep.mubr.f32.mxu0 0.0
      %565 = vmatmul.mubr.f32.gmra.mrb[0].mxu0 %v372
      %v566 = vpop.f32.mrb[0].mxu0
      %v567 = vadd.f32 %v306, %v566
      %v568 = vpop.f32.mrb[0].mxu0
      %v569 = vadd.f32 %v310, %v568
      %570 = vmatprep.mubr.f32.mxu0 0.0
      %571 = vmatmul.mubr.f32.gmra.mrb[0].mxu0 %v375
      %v572 = vpop.f32.mrb[0].mxu0
      %v573 = vadd.f32 %v306, %v572
      %v574 = vpop.f32.mrb[0].mxu0
      %v575 = vadd.f32 %v310, %v574
      %576 = vmatprep.mubr.f32.mxu0 0.0
      %577 = vmatmul.mubr.f32.gmra.mrb[0].mxu0 %v378
      %v578 = vpop.f32.mrb[0].mxu0
      %v579 = vadd.f32 %v306, %v578
      %v580 = vpop.f32.mrb[0].mxu0
      %v581 = vadd.f32 %v310, %v580
      %582 = vmatprep.mubr.f32.mxu0 0.0
      %583 = vmatmul.mubr.f32.gmra.mrb[0].mxu0 %v381
      %v584 = vpop.f32.mrb[0].mxu0
      %v585 = vadd.f32 %v306, %v584
      %v586 = vpop.f32.mrb[0].mxu0
      %v587 = vadd.f32 %v310, %v586
      %588 = vmatprep.mubr.f32.mxu0 0.0
      %589 = vmatmul.mubr.f32.gmra.mrb[0].mxu0 %v384
      %v590 = vpop.f32.mrb[0].mxu0
      %v591 = vadd.f32 %v306, %v590
      %v592 = vpop.f32.mrb[0].mxu0
      %v593 = vadd.f32 %v310, %v592
      %594 = vdwg.mxu0
      %v595 = vmax.f32 %v453, 0.0
      %v596 = vmax.f32 %v455, 0.0
      %v597 = vmax.f32 %v459, 0.0
      %v598 = vmax.f32 %v461, 0.0
      %v599 = vmax.f32 %v465, 0.0
      %v600 = vmax.f32 %v467, 0.0
      %v601 = vmax.f32 %v471, 0.0
      %v602 = vmax.f32 %v473, 0.0
      %v603 = vmax.f32 %v477, 0.0
      %v604 = vmax.f32 %v479, 0.0
      %v605 = vmax.f32 %v483, 0.0
      %v606 = vmax.f32 %v485, 0.0
      %v607 = vmax.f32 %v489, 0.0
      %v608 = vmax.f32 %v491, 0.0
      %v609 = vmax.f32 %v495, 0.0
      %v610 = vmax.f32 %v497, 0.0
      %v611 = vmax.f32 %v501, 0.0
      %v612 = vmax.f32 %v503, 0.0
      %v613 = vmax.f32 %v507, 0.0
      %v614 = vmax.f32 %v509, 0.0
      %v615 = vmax.f32 %v513, 0.0
      %v616 = vmax.f32 %v515, 0.0
      %v617 = vmax.f32 %v519, 0.0
      %v618 = vmax.f32 %v521, 0.0
      %v619 = vmax.f32 %v525, 0.0
      %v620 = vmax.f32 %v527, 0.0
      %v621 = vmax.f32 %v531, 0.0
      %v622 = vmax.f32 %v533, 0.0
      %v623 = vmax.f32 %v537, 0.0
      %v624 = vmax.f32 %v539, 0.0
      %v625 = vmax.f32 %v543, 0.0
      %v626 = vmax.f32 %v545, 0.0
      %v627 = vmax.f32 %v549, 0.0
      %v628 = vmax.f32 %v551, 0.0
      %v629 = vmax.f32 %v555, 0.0
      %v630 = vmax.f32 %v557, 0.0
      %v631 = vmax.f32 %v561, 0.0
      %v632 = vmax.f32 %v563, 0.0
      %v633 = vmax.f32 %v567, 0.0
      %v634 = vmax.f32 %v569, 0.0
      %v635 = vmax.f32 %v573, 0.0
      %v636 = vmax.f32 %v575, 0.0
      %v637 = vmax.f32 %v579, 0.0
      %v638 = vmax.f32 %v581, 0.0
      %v639 = vmax.f32 %v585, 0.0
      %v640 = vmax.f32 %v587, 0.0
      %v641 = vmax.f32 %v591, 0.0
      %v642 = vmax.f32 %v593, 0.0
      %v643 = vld [vmem:[%s3] sm:$0xff]
      %v644 = vld [vmem:[%s3 + $0x8] sm:$0xff]
      %v645 = vld [vmem:[%s3 + $0x10] sm:$0xff]
      %v646 = vld [vmem:[%s3 + $0x18] sm:$0xff]
      %v647 = vld [vmem:[%s3 + $0x20] sm:$0xff]
      %v648 = vld [vmem:[%s3 + $0x28] sm:$0xff]
      %v649 = vld [vmem:[%s3 + $0x30] sm:$0xff]
      %v650 = vld [vmem:[%s3 + $0x38] sm:$0xff]
      %v651 = vld [vmem:[%s3 + $0x40] sm:$0xff]
      %v652 = vld [vmem:[%s3 + $0x48] sm:$0xff]
      %v653 = vld [vmem:[%s3 + $0x50] sm:$0xff]
      %v654 = vld [vmem:[%s3 + $0x58] sm:$0xff]
      %v655 = vld [vmem:[%s3 + $0x60] sm:$0xff]
      %v656 = vld [vmem:[%s3 + $0x68] sm:$0xff]
      %v657 = vld [vmem:[%s3 + $0x70] sm:$0xff]
      %v658 = vld [vmem:[%s3 + $0x78] sm:$0xff]
      %v659 = vld [vmem:[%s3 + $0x80] sm:$0xff]
      %v660 = vld [vmem:[%s3 + $0x88] sm:$0xff]
      %v661 = vld [vmem:[%s3 + $0x90] sm:$0xff]
      %v662 = vld [vmem:[%s3 + $0x98] sm:$0xff]
      %v663 = vld [vmem:[%s3 + $0xa0] sm:$0xff]
      %v664 = vld [vmem:[%s3 + $0xa8] sm:$0xff]
      %v665 = vld [vmem:[%s3 + $0xb0] sm:$0xff]
      %v666 = vld [vmem:[%s3 + $0xb8] sm:$0xff]
      %v667 = vld [vmem:[%s3 + $0xc0] sm:$0xff]
      %v668 = vld [vmem:[%s3 + $0xc8] sm:$0xff]
      %v669 = vld [vmem:[%s3 + $0xd0] sm:$0xff]
      %v670 = vld [vmem:[%s3 + $0xd8] sm:$0xff]
      %v671 = vld [vmem:[%s3 + $0xe0] sm:$0xff]
      %v672 = vld [vmem:[%s3 + $0xe8] sm:$0xff]
      %v673 = vld [vmem:[%s3 + $0xf0] sm:$0xff]
      %v674 = vld [vmem:[%s3 + $0xf8] sm:$0xff]
      %v675 = vld [vmem:[%s4] sm:$0x1]
      %v677 = vlaneseq
      %v678 = vshrl.u32 %v677, 7
      %v679 = vsub.s32 0, %v678
      %v680 = vrot.slane %v675, %v679
      %682 = vmatprep.subr.mxu0 0.0
      %683 = vmatpush1.msra.mxu0 %v643
      %684 = vmatprep.subr.mxu0 0.0
      %685 = vmatpush1.msra.mxu0 %v644
      %686 = vmatprep.subr.mxu0 0.0
      %687 = vmatpush1.msra.mxu0 %v645
      %688 = vmatprep.subr.mxu0 0.0
      %689 = vmatpush1.msra.mxu0 %v646
      %690 = vmatprep.subr.mxu0 0.0
      %691 = vmatpush1.msra.mxu0 %v647
      %692 = vmatprep.subr.mxu0 0.0
      %693 = vmatpush1.msra.mxu0 %v648
      %694 = vmatprep.subr.mxu0 0.0
      %695 = vmatpush1.msra.mxu0 %v649
      %696 = vmatprep.subr.mxu0 0.0
      %697 = vmatpush1.msra.mxu0 %v650
      %698 = vmatprep.subr.mxu0 0.0
      %699 = vmatpush1.msra.mxu0 %v651
      %700 = vmatprep.subr.mxu0 0.0
      %701 = vmatpush1.msra.mxu0 %v652
      %702 = vmatprep.subr.mxu0 0.0
      %703 = vmatpush1.msra.mxu0 %v653
      %704 = vmatprep.subr.mxu0 0.0
      %705 = vmatpush1.msra.mxu0 %v654
      %706 = vmatprep.subr.mxu0 0.0
      %707 = vmatpush1.msra.mxu0 %v655
      %708 = vmatprep.subr.mxu0 0.0
      %709 = vmatpush1.msra.mxu0 %v656
      %710 = vmatprep.subr.mxu0 0.0
      %711 = vmatpush1.msra.mxu0 %v657
      %712 = vmatprep.subr.mxu0 0.0
      %713 = vmatpush1.msra.mxu0 %v658
      %714 = vmatprep.subr.mxu0 0.0
      %715 = vmatpush1.msra.mxu0 %v659
      %716 = vmatprep.subr.mxu0 0.0
      %717 = vmatpush1.msra.mxu0 %v660
      %718 = vmatprep.subr.mxu0 0.0
      %719 = vmatpush1.msra.mxu0 %v661
      %720 = vmatprep.subr.mxu0 0.0
      %721 = vmatpush1.msra.mxu0 %v662
      %722 = vmatprep.subr.mxu0 0.0
      %723 = vmatpush1.msra.mxu0 %v663
      %724 = vmatprep.subr.mxu0 0.0
      %725 = vmatpush1.msra.mxu0 %v664
      %726 = vmatprep.subr.mxu0 0.0
      %727 = vmatpush1.msra.mxu0 %v665
      %728 = vmatprep.subr.mxu0 0.0
      %729 = vmatpush1.msra.mxu0 %v666
      %730 = vmatprep.subr.mxu0 0.0
      %731 = vmatpush1.msra.mxu0 %v667
      %732 = vmatprep.subr.mxu0 0.0
      %733 = vmatpush1.msra.mxu0 %v668
      %734 = vmatprep.subr.mxu0 0.0
      %735 = vmatpush1.msra.mxu0 %v669
      %736 = vmatprep.subr.mxu0 0.0
      %737 = vmatpush1.msra.mxu0 %v670
      %738 = vmatprep.subr.mxu0 0.0
      %739 = vmatpush1.msra.mxu0 %v671
      %740 = vmatprep.subr.mxu0 0.0
      %741 = vmatpush1.msra.mxu0 %v672
      %742 = vmatprep.subr.mxu0 0.0
      %743 = vmatpush1.msra.mxu0 %v673
      %744 = vmatprep.subr.mxu0 0.0
      %745 = vmatpush1.msra.mxu0 %v674
      %746 = vmatprep.mubr.f32.mxu0 %v596
      %747 = vmatmul.mubr.f32.gmra.mrb[0].mxu0 %v595
      %v748 = vpop.f32.mrb[0].mxu0
      %v749 = vadd.f32 %v680, %v748
      %v750 = vpop.f32.mrb[0].mxu0
      %751 = vmatprep.mubr.f32.mxu0 %v598
      %752 = vmatmul.mubr.f32.gmra.mrb[0].mxu0 %v597
      %v753 = vpop.f32.mrb[0].mxu0
      %v754 = vadd.f32 %v680, %v753
      %v755 = vpop.f32.mrb[0].mxu0
      %756 = vmatprep.mubr.f32.mxu0 %v600
      %757 = vmatmul.mubr.f32.gmra.mrb[0].mxu0 %v599
      %v758 = vpop.f32.mrb[0].mxu0
      %v759 = vadd.f32 %v680, %v758
      %v760 = vpop.f32.mrb[0].mxu0
      %761 = vmatprep.mubr.f32.mxu0 %v602
      %762 = vmatmul.mubr.f32.gmra.mrb[0].mxu0 %v601
      %v763 = vpop.f32.mrb[0].mxu0
      %v764 = vadd.f32 %v680, %v763
      %v765 = vpop.f32.mrb[0].mxu0
      %766 = vmatprep.mubr.f32.mxu0 %v604
      %767 = vmatmul.mubr.f32.gmra.mrb[0].mxu0 %v603
      %v768 = vpop.f32.mrb[0].mxu0
      %v769 = vadd.f32 %v680, %v768
      %v770 = vpop.f32.mrb[0].mxu0
      %771 = vmatprep.mubr.f32.mxu0 %v606
      %772 = vmatmul.mubr.f32.gmra.mrb[0].mxu0 %v605
      %v773 = vpop.f32.mrb[0].mxu0
      %v774 = vadd.f32 %v680, %v773
      %v775 = vpop.f32.mrb[0].mxu0
      %776 = vmatprep.mubr.f32.mxu0 %v608
      %777 = vmatmul.mubr.f32.gmra.mrb[0].mxu0 %v607
      %v778 = vpop.f32.mrb[0].mxu0
      %v779 = vadd.f32 %v680, %v778
      %v780 = vpop.f32.mrb[0].mxu0
      %781 = vmatprep.mubr.f32.mxu0 %v610
      %782 = vmatmul.mubr.f32.gmra.mrb[0].mxu0 %v609
      %v783 = vpop.f32.mrb[0].mxu0
      %v784 = vadd.f32 %v680, %v783
      %v785 = vpop.f32.mrb[0].mxu0
      %786 = vmatprep.mubr.f32.mxu0 %v612
      %787 = vmatmul.mubr.f32.gmra.mrb[0].mxu0 %v611
      %v788 = vpop.f32.mrb[0].mxu0
      %v789 = vadd.f32 %v680, %v788
      %v790 = vpop.f32.mrb[0].mxu0
      %791 = vmatprep.mubr.f32.mxu0 %v614
      %792 = vmatmul.mubr.f32.gmra.mrb[0].mxu0 %v613
      %v793 = vpop.f32.mrb[0].mxu0
      %v794 = vadd.f32 %v680, %v793
      %v795 = vpop.f32.mrb[0].mxu0
      %796 = vmatprep.mubr.f32.mxu0 %v616
      %797 = vmatmul.mubr.f32.gmra.mrb[0].mxu0 %v615
      %v798 = vpop.f32.mrb[0].mxu0
      %v799 = vadd.f32 %v680, %v798
      %v800 = vpop.f32.mrb[0].mxu0
      %801 = vmatprep.mubr.f32.mxu0 %v618
      %802 = vmatmul.mubr.f32.gmra.mrb[0].mxu0 %v617
      %v803 = vpop.f32.mrb[0].mxu0
      %v804 = vadd.f32 %v680, %v803
      %v805 = vpop.f32.mrb[0].mxu0
      %806 = vmatprep.mubr.f32.mxu0 %v620
      %807 = vmatmul.mubr.f32.gmra.mrb[0].mxu0 %v619
      %v808 = vpop.f32.mrb[0].mxu0
      %v809 = vadd.f32 %v680, %v808
      %v810 = vpop.f32.mrb[0].mxu0
      %811 = vmatprep.mubr.f32.mxu0 %v622
      %812 = vmatmul.mubr.f32.gmra.mrb[0].mxu0 %v621
      %v813 = vpop.f32.mrb[0].mxu0
      %v814 = vadd.f32 %v680, %v813
      %v815 = vpop.f32.mrb[0].mxu0
      %816 = vmatprep.mubr.f32.mxu0 %v624
      %817 = vmatmul.mubr.f32.gmra.mrb[0].mxu0 %v623
      %v818 = vpop.f32.mrb[0].mxu0
      %v819 = vadd.f32 %v680, %v818
      %v820 = vpop.f32.mrb[0].mxu0
      %821 = vmatprep.mubr.f32.mxu0 %v626
      %822 = vmatmul.mubr.f32.gmra.mrb[0].mxu0 %v625
      %v823 = vpop.f32.mrb[0].mxu0
      %v824 = vadd.f32 %v680, %v823
      %v825 = vpop.f32.mrb[0].mxu0
      %826 = vmatprep.mubr.f32.mxu0 %v628
      %827 = vmatmul.mubr.f32.gmra.mrb[0].mxu0 %v627
      %v828 = vpop.f32.mrb[0].mxu0
      %v829 = vadd.f32 %v680, %v828
      %v830 = vpop.f32.mrb[0].mxu0
      %831 = vmatprep.mubr.f32.mxu0 %v630
      %832 = vmatmul.mubr.f32.gmra.mrb[0].mxu0 %v629
      %v833 = vpop.f32.mrb[0].mxu0
      %v834 = vadd.f32 %v680, %v833
      %v835 = vpop.f32.mrb[0].mxu0
      %836 = vmatprep.mubr.f32.mxu0 %v632
      %837 = vmatmul.mubr.f32.gmra.mrb[0].mxu0 %v631
      %v838 = vpop.f32.mrb[0].mxu0
      %v839 = vadd.f32 %v680, %v838
      %v840 = vpop.f32.mrb[0].mxu0
      %841 = vmatprep.mubr.f32.mxu0 %v634
      %842 = vmatmul.mubr.f32.gmra.mrb[0].mxu0 %v633
      %v843 = vpop.f32.mrb[0].mxu0
      %v844 = vadd.f32 %v680, %v843
      %v845 = vpop.f32.mrb[0].mxu0
      %846 = vmatprep.mubr.f32.mxu0 %v636
      %847 = vmatmul.mubr.f32.gmra.mrb[0].mxu0 %v635
      %v848 = vpop.f32.mrb[0].mxu0
      %v849 = vadd.f32 %v680, %v848
      %v850 = vpop.f32.mrb[0].mxu0
      %851 = vmatprep.mubr.f32.mxu0 %v638
      %852 = vmatmul.mubr.f32.gmra.mrb[0].mxu0 %v637
      %v853 = vpop.f32.mrb[0].mxu0
      %v854 = vadd.f32 %v680, %v853
      %v855 = vpop.f32.mrb[0].mxu0
      %856 = vmatprep.mubr.f32.mxu0 %v640
      %857 = vmatmul.mubr.f32.gmra.mrb[0].mxu0 %v639
      %v858 = vpop.f32.mrb[0].mxu0
      %v859 = vadd.f32 %v680, %v858
      %v860 = vpop.f32.mrb[0].mxu0
      %861 = vmatprep.mubr.f32.mxu0 %v642
      %862 = vmatmul.mubr.f32.gmra.mrb[0].mxu0 %v641
      %v863 = vpop.f32.mrb[0].mxu0
      %v864 = vadd.f32 %v680, %v863
      %v865 = vpop.f32.mrb[0].mxu0
      %866 = vdwg.mxu0
      %vm867 = vcmask 64512
      %868 = vst.msk [vmem:[%s261] sm:$0xff] %vm867, %v749
      %869 = vst.msk [vmem:[%s261 + $0x8] sm:$0xff] %vm867, %v754
      %870 = vst.msk [vmem:[%s261 + $0x10] sm:$0xff] %vm867, %v759
      %871 = vst.msk [vmem:[%s261 + $0x18] sm:$0xff] %vm867, %v764
      %872 = vst.msk [vmem:[%s261 + $0x20] sm:$0xff] %vm867, %v769
      %873 = vst.msk [vmem:[%s261 + $0x28] sm:$0xff] %vm867, %v774
      %874 = vst.msk [vmem:[%s261 + $0x30] sm:$0xff] %vm867, %v779
      %875 = vst.msk [vmem:[%s261 + $0x38] sm:$0xff] %vm867, %v784
      %876 = vst.msk [vmem:[%s261 + $0x40] sm:$0xff] %vm867, %v789
      %877 = vst.msk [vmem:[%s261 + $0x48] sm:$0xff] %vm867, %v794
      %878 = vst.msk [vmem:[%s261 + $0x50] sm:$0xff] %vm867, %v799
      %879 = vst.msk [vmem:[%s261 + $0x58] sm:$0xff] %vm867, %v804
      %880 = vst.msk [vmem:[%s261 + $0x60] sm:$0xff] %vm867, %v809
      %881 = vst.msk [vmem:[%s261 + $0x68] sm:$0xff] %vm867, %v814
      %882 = vst.msk [vmem:[%s261 + $0x70] sm:$0xff] %vm867, %v819
      %883 = vst.msk [vmem:[%s261 + $0x78] sm:$0xff] %vm867, %v824
      %884 = vst.msk [vmem:[%s261 + $0x80] sm:$0xff] %vm867, %v829
      %885 = vst.msk [vmem:[%s261 + $0x88] sm:$0xff] %vm867, %v834
      %886 = vst.msk [vmem:[%s261 + $0x90] sm:$0xff] %vm867, %v839
      %887 = vst.msk [vmem:[%s261 + $0x98] sm:$0xff] %vm867, %v844
      %888 = vst.msk [vmem:[%s261 + $0xa0] sm:$0xff] %vm867, %v849
      %889 = vst.msk [vmem:[%s261 + $0xa8] sm:$0xff] %vm867, %v854
      %890 = vst.msk [vmem:[%s261 + $0xb0] sm:$0xff] %vm867, %v859
      %891 = vst.msk [vmem:[%s261 + $0xb8] sm:$0xff] %vm867, %v864
      %916 = vrot.lane.b32.xlu0 %v749, 120
      %v917 = vpop.permute.xlu0 %916
      %918 = vrot.lane.b32.xlu0 %v754, 120
      %v919 = vpop.permute.xlu0 %918
      %920 = vrot.lane.b32.xlu0 %v759, 120
      %v921 = vpop.permute.xlu0 %920
      %922 = vrot.lane.b32.xlu0 %v764, 120
      %v923 = vpop.permute.xlu0 %922
      %924 = vrot.lane.b32.xlu0 %v769, 120
      %v925 = vpop.permute.xlu0 %924
      %926 = vrot.lane.b32.xlu0 %v774, 120
      %v927 = vpop.permute.xlu0 %926
      %928 = vrot.lane.b32.xlu0 %v779, 120
      %v929 = vpop.permute.xlu0 %928
      %930 = vrot.lane.b32.xlu0 %v784, 120
      %v931 = vpop.permute.xlu0 %930
      %932 = vrot.lane.b32.xlu0 %v789, 120
      %v933 = vpop.permute.xlu0 %932
      %934 = vrot.lane.b32.xlu0 %v794, 120
      %v935 = vpop.permute.xlu0 %934
      %936 = vrot.lane.b32.xlu0 %v799, 120
      %v937 = vpop.permute.xlu0 %936
      %938 = vrot.lane.b32.xlu0 %v804, 120
      %v939 = vpop.permute.xlu0 %938
      %940 = vrot.lane.b32.xlu0 %v809, 120
      %v941 = vpop.permute.xlu0 %940
      %942 = vrot.lane.b32.xlu0 %v814, 120
      %v943 = vpop.permute.xlu0 %942
      %944 = vrot.lane.b32.xlu0 %v819, 120
      %v945 = vpop.permute.xlu0 %944
      %946 = vrot.lane.b32.xlu0 %v824, 120
      %v947 = vpop.permute.xlu0 %946
      %948 = vrot.lane.b32.xlu0 %v829, 120
      %v949 = vpop.permute.xlu0 %948
      %950 = vrot.lane.b32.xlu0 %v834, 120
      %v951 = vpop.permute.xlu0 %950
      %952 = vrot.lane.b32.xlu0 %v839, 120
      %v953 = vpop.permute.xlu0 %952
      %954 = vrot.lane.b32.xlu0 %v844, 120
      %v955 = vpop.permute.xlu0 %954
      %956 = vrot.lane.b32.xlu0 %v849, 120
      %v957 = vpop.permute.xlu0 %956
      %958 = vrot.lane.b32.xlu0 %v854, 120
      %v959 = vpop.permute.xlu0 %958
      %960 = vrot.lane.b32.xlu0 %v859, 120
      %v961 = vpop.permute.xlu0 %960
      %962 = vrot.lane.b32.xlu0 %v864, 120
      %v963 = vpop.permute.xlu0 %962
      %vm988 = vcmask 7168
      %989 = vst.msk [vmem:[%s267] sm:$0xff] %vm988, %v917
      %990 = vst.msk [vmem:[%s267 + $0x8] sm:$0xff] %vm988, %v919
      %991 = vst.msk [vmem:[%s267 + $0x10] sm:$0xff] %vm988, %v921
      %992 = vst.msk [vmem:[%s267 + $0x18] sm:$0xff] %vm988, %v923
      %993 = vst.msk [vmem:[%s267 + $0x20] sm:$0xff] %vm988, %v925
      %994 = vst.msk [vmem:[%s267 + $0x28] sm:$0xff] %vm988, %v927
      %995 = vst.msk [vmem:[%s267 + $0x30] sm:$0xff] %vm988, %v929
      %996 = vst.msk [vmem:[%s267 + $0x38] sm:$0xff] %vm988, %v931
      %997 = vst.msk [vmem:[%s267 + $0x40] sm:$0xff] %vm988, %v933
      %998 = vst.msk [vmem:[%s267 + $0x48] sm:$0xff] %vm988, %v935
      %999 = vst.msk [vmem:[%s267 + $0x50] sm:$0xff] %vm988, %v937
      %1000 = vst.msk [vmem:[%s267 + $0x58] sm:$0xff] %vm988, %v939
      %1001 = vst.msk [vmem:[%s267 + $0x60] sm:$0xff] %vm988, %v941
      %1002 = vst.msk [vmem:[%s267 + $0x68] sm:$0xff] %vm988, %v943
      %1003 = vst.msk [vmem:[%s267 + $0x70] sm:$0xff] %vm988, %v945
      %1004 = vst.msk [vmem:[%s267 + $0x78] sm:$0xff] %vm988, %v947
      %1005 = vst.msk [vmem:[%s267 + $0x80] sm:$0xff] %vm988, %v949
      %1006 = vst.msk [vmem:[%s267 + $0x88] sm:$0xff] %vm988, %v951
      %1007 = vst.msk [vmem:[%s267 + $0x90] sm:$0xff] %vm988, %v953
      %1008 = vst.msk [vmem:[%s267 + $0x98] sm:$0xff] %vm988, %v955
      %1009 = vst.msk [vmem:[%s267 + $0xa0] sm:$0xff] %vm988, %v957
      %1010 = vst.msk [vmem:[%s267 + $0xa8] sm:$0xff] %vm988, %v959
      %1011 = vst.msk [vmem:[%s267 + $0xb0] sm:$0xff] %vm988, %v961
      %1012 = vst.msk [vmem:[%s267 + $0xb8] sm:$0xff] %vm988, %v963
      %s1013 = smul.u32 24, %s18
      %p1014 = scmp.lt.s32.totalorder %s1013, 47
      %s1015 = scalar_select %p1014, %s1013, 47
      %s1016 = smul.addr %s1015, 8
      %s1017 = scalar_lea.vmem %s5, %s1016
      %s1018 = smul.u32 24, %s18
      %p1019 = scmp.lt.s32.totalorder %s1018, 47
      %s1020 = scalar_select %p1019, %s1018, 47
      %s1021 = smul.addr %s1020, 8
      %s1022 = scalar_lea.vmem %s6, %s1021
      // Predicated region
      $region41: #{actor_critic_forward.1} parent=39 // pred_check
        %p1023 = pneg %p146
      $region42: #{actor_critic_forward.1} parent=39 // pred_check_branch
        %1025 = sbr.rel (%p1023) target = $region44
      $region43: #{actor_critic_forward.1} parent=39 // pred_region
        %s1026 = smul.u32 24, %s18
      $region44: #{actor_critic_forward.1} parent=39 // pred_fallthru
        _
      // Predicated region
      $region45: #{actor_critic_forward.1} parent=39 // pred_check
        %p1027 = pneg %p172
      $region46: #{actor_critic_forward.1} parent=39 // pred_check_branch
        %1029 = sbr.rel (%p1027) target = $region48
      $region47: #{actor_critic_forward.1} parent=39 // pred_region
        %s1030 = smul.u32 24, %s18
      $region48: #{actor_critic_forward.1} parent=39 // pred_fallthru
        _
    $region40: #{actor_critic_forward.1} parent=5 // pred_fallthru
      _
    %p1031 = scmp.le.s32.totalorder 2, %s13
    // Predicated region
    $region49: #{actor_critic_forward.1} parent=5 // pred_check
      %p1032 = pneg %p1031
    $region50: #{actor_critic_forward.1} parent=5 // pred_check_branch
      %1034 = sbr.rel (%p1032) target = $region52
    $region51: #{actor_critic_forward.1} parent=5 // pred_region
      %s1035 = ssub.s32 %s13, 2
      // Predicated region
      $region53: #{actor_critic_forward.1} parent=51 // pred_check
        %p1036 = pneg %p152
      $region54: #{actor_critic_forward.1} parent=51 // pred_check_branch
        %1038 = sbr.rel (%p1036) target = $region56
      $region55: #{actor_critic_forward.1} parent=51 // pred_region
        %s1039 = smul.u32 24, %s19
        %p1040 = scmp.lt.s32.totalorder %s1039, 47
        %s1041 = scalar_select %p1040, %s1039, 47
        %s1042 = smul.addr %s1041, 8
        %s1043 = scalar_lea.vmem %s5, %s1042
      $region56: #{actor_critic_forward.1} parent=51 // pred_fallthru
        _
      // Predicated region
      $region57: #{actor_critic_forward.1} parent=51 // pred_check
        %p1044 = pneg %p178
      $region58: #{actor_critic_forward.1} parent=51 // pred_check_branch
        %1046 = sbr.rel (%p1044) target = $region60
      $region59: #{actor_critic_forward.1} parent=51 // pred_region
        %s1047 = smul.u32 24, %s19
        %p1048 = scmp.lt.s32.totalorder %s1047, 47
        %s1049 = scalar_select %p1048, %s1047, 47
        %s1050 = smul.addr %s1049, 8
        %s1051 = scalar_lea.vmem %s6, %s1050
      $region60: #{actor_critic_forward.1} parent=51 // pred_fallthru
        _
    $region52: #{actor_critic_forward.1} parent=5 // pred_fallthru
      _
  $region6: #{actor_critic_forward.1} parent=0 // loop_footer
    %s17 = sadd.s32 1, %s13
  $region7: #{actor_critic_forward.1} parent=0 // loop_footer_branch
    %12 = sbr.rel target = $region3
  $region8: #{actor_critic_forward.1} parent=0 // loop_exit
    _

</llo_original>
